<compile_context>
chip_gen: v6e
topology: v6e:2x2x1
jax: 0.10.0
libtpu: 0.0.40
codegen_flags: <defaults>
</compile_context>

<pallas_src>
import functools

import jax
import jax.numpy as jnp
from jax.experimental import pallas as pl
from jax.experimental.pallas import tpu as pltpu

LANE = 128
_BN_EPS = 1e-5


def _round_up(x, m):
    return (x + m - 1) // m * m


def _vmem_limit_bytes():
    """~Half of physical VMEM: 64 MiB on v5e/v6e (128 MiB), 32 MiB on v7x (64 MiB)."""
    cap = 0
    try:
        cap = int(getattr(pltpu.get_tpu_info(), "vmem_capacity_bytes", 0) or 0)
    except Exception:  # pragma: no cover - info query unavailable
        cap = 0
    if cap <= 0:
        cap = 128 * 1024 * 1024
    return int(min(cap // 2, 96 * 1024 * 1024))


def _default_block_b(vmem_limit):
    # Larger tiles amortize the ~0.35us/grid-step overhead on v5e/v6e; keep
    # tiles smaller on v7x's 64 MiB VMEM.
    return 1024 if vmem_limit >= 64 * 1024 * 1024 else 512


# ---------------------------------------------------------------------------
# Pass 1: per-batch-tile partial BatchNorm statistics of h = x @ W1.
#   Emits sum / sum-of-squares as (1, 1, lat_p) blocks of an (n_tiles, 1, lat_p)
#   output -> no cross-tile dependency, fully "parallel" (megacore on v7x).
#   h itself is NOT written to HBM (recomputed in pass 2).
# ---------------------------------------------------------------------------
def _stats_kernel(x_ref, w1_ref, sum_ref, sumsq_ref):
    # NOTE: b1 is intentionally not added (exact no-op under train-mode BN,
    # and it keeps zero-padded batch rows out of the statistics).
    h = jnp.dot(x_ref[...], w1_ref[...], preferred_element_type=jnp.float32)
    sum_ref[...] = jnp.sum(h, axis=0, keepdims=True)[None]
    sumsq_ref[...] = jnp.sum(h * h, axis=0, keepdims=True)[None]


# ---------------------------------------------------------------------------
# Pass 2: recompute h = x @ W1, folded BatchNorm (scale/shift) -> ReLU ->
#         second Linear.  Fully "parallel" across batch tiles.
# ---------------------------------------------------------------------------
def _fused_kernel(x_ref, w1_ref, scale_ref, shift_ref, w2_ref, b2_ref, o_ref):
    h = jnp.dot(x_ref[...], w1_ref[...], preferred_element_type=jnp.float32)
    hn = jnp.maximum(h * scale_ref[...] + shift_ref[...], 0.0)
    y = jnp.dot(hn.astype(w2_ref.dtype), w2_ref[...],
                preferred_element_type=jnp.float32)
    o_ref[...] = (y + b2_ref[...]).astype(o_ref.dtype)


@functools.partial(jax.jit, static_argnames=("block_b",))
def mlp_forward(x, w1, b1, gamma, beta, w2, b2, *, block_b=None):
    """Forward of MLP(inp->latent) + BatchNorm1d(train) + ReLU + Linear(latent->out)."""
    del b1  # exact no-op under train-mode BatchNorm (removed by mean-centering)

    B, inp_dim = x.shape
    latent_dim = w1.shape[1]
    out_dim = w2.shape[1]

    vmem_limit = _vmem_limit_bytes()
    if block_b is None:
        block_b = _default_block_b(vmem_limit)

    # Pad feature dims to lane multiples (full MXU tiles, lane-dense stores)
    # and batch to a whole number of tiles (zero rows contribute nothing to
    # the statistics since b1 is dropped; padded output rows are sliced off).
    inp_p = _round_up(inp_dim, LANE)
    lat_p = _round_up(latent_dim, LANE)
    out_p = _round_up(out_dim, LANE)
    tb = min(block_b, _round_up(B, 8))
    b_p = _round_up(B, tb)
    n_tiles = b_p // tb

    f32 = jnp.float32
    bf16 = jnp.bfloat16

    # bf16 matmul operands; f32 for everything feeding the BN math / bias add.
    x_b = jnp.pad(x.astype(f32), ((0, b_p - B), (0, inp_p - inp_dim))).astype(bf16)
    w1_b = jnp.pad(w1.astype(f32), ((0, inp_p - inp_dim), (0, lat_p - latent_dim))).astype(bf16)
    w2_b = jnp.pad(w2.astype(f32), ((0, lat_p - latent_dim), (0, out_p - out_dim))).astype(bf16)
    gamma_p = jnp.pad(gamma.astype(f32).reshape(1, -1), ((0, 0), (0, lat_p - latent_dim)))
    beta_p = jnp.pad(beta.astype(f32).reshape(1, -1), ((0, 0), (0, lat_p - latent_dim)))
    b2_p = jnp.pad(b2.astype(f32).reshape(1, -1), ((0, 0), (0, out_p - out_dim)))

    # ---- pass 1: per-tile partial BN statistics (no h writeback) ----------
    part_sum, part_sq = pl.pallas_call(
        _stats_kernel,
        out_shape=(
            jax.ShapeDtypeStruct((n_tiles, 1, lat_p), f32),
            jax.ShapeDtypeStruct((n_tiles, 1, lat_p), f32),
        ),
        grid_spec=pltpu.PrefetchScalarGridSpec(
            num_scalar_prefetch=0,
            grid=(n_tiles,),
            in_specs=[
                pl.BlockSpec((tb, inp_p), lambda i: (i, 0)),
                pl.BlockSpec((inp_p, lat_p), lambda i: (0, 0)),
            ],
            out_specs=[
                pl.BlockSpec((1, 1, lat_p), lambda i: (i, 0, 0)),
                pl.BlockSpec((1, 1, lat_p), lambda i: (i, 0, 0)),
            ],
        ),
        compiler_params=pltpu.CompilerParams(
            dimension_semantics=("parallel",),  # per-tile partials -> megacore OK
            vmem_limit_bytes=vmem_limit,
        ),
        cost_estimate=pl.CostEstimate(
            flops=2 * b_p * inp_p * lat_p + 3 * b_p * lat_p,
            transcendentals=0,
            bytes_accessed=2 * (b_p * inp_p + inp_p * lat_p)
            + 4 * (2 * n_tiles * lat_p),
        ),
    )(x_b, w1_b)

    # ---- fold BN into one scale/shift (tiny [1, lat_p] f32 vectors) --------
    s1 = jnp.sum(part_sum, axis=0)   # (1, lat_p)
    s2 = jnp.sum(part_sq, axis=0)    # (1, lat_p)
    inv_b = jnp.float32(1.0 / B)     # divide by the REAL batch size
    mean = s1 * inv_b
    var = jnp.maximum(s2 * inv_b - mean * mean, 0.0)  # biased variance, clamped
    scale = gamma_p * jax.lax.rsqrt(var + _BN_EPS)
    shift = beta_p - mean * scale

    # ---- pass 2: recompute h, normalize + ReLU + second Linear -------------
    y_p = pl.pallas_call(
        _fused_kernel,
        out_shape=jax.ShapeDtypeStruct((b_p, out_p), f32),
        grid_spec=pltpu.PrefetchScalarGridSpec(
            num_scalar_prefetch=0,
            grid=(n_tiles,),
            in_specs=[
                pl.BlockSpec((tb, inp_p), lambda i: (i, 0)),
                pl.BlockSpec((inp_p, lat_p), lambda i: (0, 0)),
                pl.BlockSpec((1, lat_p), lambda i: (0, 0)),
                pl.BlockSpec((1, lat_p), lambda i: (0, 0)),
                pl.BlockSpec((lat_p, out_p), lambda i: (0, 0)),
                pl.BlockSpec((1, out_p), lambda i: (0, 0)),
            ],
            out_specs=pl.BlockSpec((tb, out_p), lambda i: (i, 0)),
        ),
        compiler_params=pltpu.CompilerParams(
            dimension_semantics=("parallel",),  # independent tiles -> megacore
            vmem_limit_bytes=vmem_limit,
        ),
        cost_estimate=pl.CostEstimate(
            flops=2 * b_p * inp_p * lat_p + 2 * b_p * lat_p * out_p + 4 * b_p * lat_p,
            transcendentals=0,
            bytes_accessed=2 * (b_p * inp_p + inp_p * lat_p + lat_p * out_p)
            + 4 * (2 * lat_p + out_p + b_p * out_p),
        ),
    )(x_b, w1_b, scale, shift, w2_b, b2_p)

    return y_p[:B, :out_dim]


def init_params(key, inp_dim, latent_dim, out_dim):
    """Deterministic init mimicking PyTorch nn.Linear defaults (U(+-1/sqrt(fan_in)))."""
    k1, k2, k3, k4 = jax.random.split(key, 4)
    bound1 = 1.0 / (inp_dim ** 0.5)
    bound2 = 1.0 / (latent_dim ** 0.5)
    w1 = jax.random.uniform(k1, (inp_dim, latent_dim), jnp.float32, -bound1, bound1)
    b1 = jax.random.uniform(k2, (latent_dim,), jnp.float32, -bound1, bound1)
    gamma = jnp.ones((latent_dim,), jnp.float32)   # BatchNorm1d weight
    beta = jnp.zeros((latent_dim,), jnp.float32)   # BatchNorm1d bias
    w2 = jax.random.uniform(k3, (latent_dim, out_dim), jnp.float32, -bound2, bound2)
    b2 = jax.random.uniform(k4, (out_dim,), jnp.float32, -bound2, bound2)
    return w1, b1, gamma, beta, w2, b2


if __name__ == "__main__":
    # MLP(inp_dim=16, latent_dim=32, out_dim=8); batch chosen non-multiple of the
    # tile so batch padding + cross-tile (partial) BatchNorm statistics are exercised.
    B, inp_dim, latent_dim, out_dim = 300, 16, 32, 8

    key = jax.random.PRNGKey(0)
    kx, kp = jax.random.split(key)
    x = jax.random.normal(kx, (B, inp_dim), jnp.float32)
    params = init_params(kp, inp_dim, latent_dim, out_dim)

    out = mlp_forward(x, *params, block_b=128)   # 3 batch tiles
    jax.block_until_ready(out)

    # Pure-JAX f32 reference of the PyTorch module forward (train-mode BatchNorm1d).
    w1, b1, gamma, beta, w2, b2 = params
    h = x @ w1 + b1
    mu = h.mean(0, keepdims=True)
    var = ((h - mu) ** 2).mean(0, keepdims=True)
    h = (h - mu) / jnp.sqrt(var + _BN_EPS) * gamma + beta
    h = jnp.maximum(h, 0.0)
    ref = h @ w2 + b2

    assert out.shape == (B, out_dim)
    # Tolerance accounts for the bf16 matmul operands (f32 accumulation) and the
    # restructured (two-pass, folded) BatchNorm statistics.
    assert jnp.allclose(out, ref, atol=3e-2, rtol=3e-2), float(
        jnp.max(jnp.abs(out - ref)))

    print("KERNEL_OK")
</pallas_src>

<mosaic_0001>
module attributes {stable_mosaic.version = 11 : i64} {
  func.func @_stats_kernel(%arg0: i32, %arg1: memref<128x128xbf16, #tpu.memory_space<vmem>>, %arg2: memref<128x128xbf16, #tpu.memory_space<vmem>>, %arg3: memref<1x1x128xf32, #tpu.memory_space<vmem>>, %arg4: memref<1x1x128xf32, #tpu.memory_space<vmem>>) attributes {dimension_semantics = [#tpu.dimension_semantics<parallel>], iteration_bounds = array<i64: 3>, scalar_prefetch = 0 : i64, scratch_operands = 0 : i64, tpu.core_type = #tpu.core_type<tc>, window_params = [{transform_indices = @transform_0, window_bounds = array<i64: 128, 128>}, {pipeline_mode = #tpu.pipeline_mode<synchronous>, transform_indices = @transform_1, window_bounds = array<i64: 128, 128>}, {transform_indices = @transform_2, window_bounds = array<i64: 1, 1, 128>}, {transform_indices = @transform_3, window_bounds = array<i64: 1, 1, 128>}]} {
    %c0 = arith.constant 0 : index
    %c0_0 = arith.constant 0 : index
    %0 = vector.load %arg1[%c0, %c0_0] : memref<128x128xbf16, #tpu.memory_space<vmem>>, vector<128x128xbf16>
    %c0_1 = arith.constant 0 : index
    %c0_2 = arith.constant 0 : index
    %1 = vector.load %arg2[%c0_1, %c0_2] : memref<128x128xbf16, #tpu.memory_space<vmem>>, vector<128x128xbf16>
    %cst = arith.constant dense<0.000000e+00> : vector<128x128xf32>
    %2 = tpu.matmul %0, %1, %cst {dimension_numbers = #tpu.dot_dimension_numbers<[1], [0], [0], [1], [0, 0, 1, 1], [], []>} : vector<128x128xbf16>, vector<128x128xbf16>, vector<128x128xf32> -> vector<128x128xf32>
    %cst_3 = arith.constant dense<0.000000e+00> : vector<128xf32>
    %3 = vector.multi_reduction <add>, %2, %cst_3 [0] : vector<128x128xf32> to vector<128xf32>
    %4 = vector.shape_cast %3 : vector<128xf32> to vector<1x128xf32>
    %5 = vector.shape_cast %4 : vector<1x128xf32> to vector<1x1x128xf32>
    %c0_4 = arith.constant 0 : index
    %c0_5 = arith.constant 0 : index
    %c0_6 = arith.constant 0 : index
    %6 = vector.load %arg3[%c0_4, %c0_5, %c0_6] : memref<1x1x128xf32, #tpu.memory_space<vmem>>, vector<1x1x128xf32>
    tpu.vector_store %arg3[%c0_4, %c0_5, %c0_6], %5 {strides = array<i32>} : memref<1x1x128xf32, #tpu.memory_space<vmem>>, vector<1x1x128xf32>,
    %7 = arith.mulf %2, %2 : vector<128x128xf32>
    %cst_7 = arith.constant dense<0.000000e+00> : vector<128xf32>
    %8 = vector.multi_reduction <add>, %7, %cst_7 [0] : vector<128x128xf32> to vector<128xf32>
    %9 = vector.shape_cast %8 : vector<128xf32> to vector<1x128xf32>
    %10 = vector.shape_cast %9 : vector<1x128xf32> to vector<1x1x128xf32>
    %c0_8 = arith.constant 0 : index
    %c0_9 = arith.constant 0 : index
    %c0_10 = arith.constant 0 : index
    %11 = vector.load %arg4[%c0_8, %c0_9, %c0_10] : memref<1x1x128xf32, #tpu.memory_space<vmem>>, vector<1x1x128xf32>
    tpu.vector_store %arg4[%c0_8, %c0_9, %c0_10], %10 {strides = array<i32>} : memref<1x1x128xf32, #tpu.memory_space<vmem>>, vector<1x1x128xf32>,
    return
  }
  func.func @transform_0(%arg0: i32) -> (i32, i32) {
    %c0_i32 = arith.constant 0 : i32
    %c0_i32_0 = arith.constant 0 : i32
    return %arg0, %c0_i32 : i32, i32
  }
  func.func @transform_1(%arg0: i32) -> (i32, i32) {
    %c0_i32 = arith.constant 0 : i32
    %c0_i32_0 = arith.constant 0 : i32
    %c0_i32_1 = arith.constant 0 : i32
    return %c0_i32, %c0_i32_0 : i32, i32
  }
  func.func @transform_2(%arg0: i32) -> (i32, i32, i32) {
    %c0_i32 = arith.constant 0 : i32
    %c0_i32_0 = arith.constant 0 : i32
    %c0_i32_1 = arith.constant 0 : i32
    return %arg0, %c0_i32, %c0_i32_0 : i32, i32, i32
  }
  func.func @transform_3(%arg0: i32) -> (i32, i32, i32) {
    %c0_i32 = arith.constant 0 : i32
    %c0_i32_0 = arith.constant 0 : i32
    %c0_i32_1 = arith.constant 0 : i32
    return %arg0, %c0_i32, %c0_i32_0 : i32, i32, i32
  }
}

module attributes {stable_mosaic.version = 11 : i64} {
  func.func @_fused_kernel(%arg0: i32, %arg1: memref<128x128xbf16, #tpu.memory_space<vmem>>, %arg2: memref<128x128xbf16, #tpu.memory_space<vmem>>, %arg3: memref<1x128xf32, #tpu.memory_space<vmem>>, %arg4: memref<1x128xf32, #tpu.memory_space<vmem>>, %arg5: memref<128x128xbf16, #tpu.memory_space<vmem>>, %arg6: memref<1x128xf32, #tpu.memory_space<vmem>>, %arg7: memref<128x128xf32, #tpu.memory_space<vmem>>) attributes {dimension_semantics = [#tpu.dimension_semantics<parallel>], iteration_bounds = array<i64: 3>, scalar_prefetch = 0 : i64, scratch_operands = 0 : i64, tpu.core_type = #tpu.core_type<tc>, window_params = [{transform_indices = @transform_0, window_bounds = array<i64: 128, 128>}, {pipeline_mode = #tpu.pipeline_mode<synchronous>, transform_indices = @transform_1, window_bounds = array<i64: 128, 128>}, {pipeline_mode = #tpu.pipeline_mode<synchronous>, transform_indices = @transform_2, window_bounds = array<i64: 1, 128>}, {pipeline_mode = #tpu.pipeline_mode<synchronous>, transform_indices = @transform_3, window_bounds = array<i64: 1, 128>}, {pipeline_mode = #tpu.pipeline_mode<synchronous>, transform_indices = @transform_4, window_bounds = array<i64: 128, 128>}, {pipeline_mode = #tpu.pipeline_mode<synchronous>, transform_indices = @transform_5, window_bounds = array<i64: 1, 128>}, {transform_indices = @transform_6, window_bounds = array<i64: 128, 128>}]} {
    %c0 = arith.constant 0 : index
    %c0_0 = arith.constant 0 : index
    %0 = vector.load %arg1[%c0, %c0_0] : memref<128x128xbf16, #tpu.memory_space<vmem>>, vector<128x128xbf16>
    %c0_1 = arith.constant 0 : index
    %c0_2 = arith.constant 0 : index
    %1 = vector.load %arg2[%c0_1, %c0_2] : memref<128x128xbf16, #tpu.memory_space<vmem>>, vector<128x128xbf16>
    %cst = arith.constant dense<0.000000e+00> : vector<128x128xf32>
    %2 = tpu.matmul %0, %1, %cst {dimension_numbers = #tpu.dot_dimension_numbers<[1], [0], [0], [1], [0, 0, 1, 1], [], []>} : vector<128x128xbf16>, vector<128x128xbf16>, vector<128x128xf32> -> vector<128x128xf32>
    %c0_3 = arith.constant 0 : index
    %c0_4 = arith.constant 0 : index
    %3 = vector.load %arg3[%c0_3, %c0_4] : memref<1x128xf32, #tpu.memory_space<vmem>>, vector<1x128xf32>
    %4 = vector.broadcast %3 : vector<1x128xf32> to vector<128x128xf32>
    %5 = arith.mulf %2, %4 : vector<128x128xf32>
    %c0_5 = arith.constant 0 : index
    %c0_6 = arith.constant 0 : index
    %6 = vector.load %arg4[%c0_5, %c0_6] : memref<1x128xf32, #tpu.memory_space<vmem>>, vector<1x128xf32>
    %7 = vector.broadcast %6 : vector<1x128xf32> to vector<128x128xf32>
    %8 = arith.addf %5, %7 : vector<128x128xf32>
    %cst_7 = arith.constant 0.000000e+00 : f32
    %9 = vector.broadcast %cst_7 : f32 to vector<128x128xf32>
    %10 = arith.maximumf %8, %9 : vector<128x128xf32>
    %11 = arith.truncf %10 : vector<128x128xf32> to vector<128x128xbf16>
    %c0_8 = arith.constant 0 : index
    %c0_9 = arith.constant 0 : index
    %12 = vector.load %arg5[%c0_8, %c0_9] : memref<128x128xbf16, #tpu.memory_space<vmem>>, vector<128x128xbf16>
    %cst_10 = arith.constant dense<0.000000e+00> : vector<128x128xf32>
    %13 = tpu.matmul %11, %12, %cst_10 {dimension_numbers = #tpu.dot_dimension_numbers<[1], [0], [0], [1], [0, 0, 1, 1], [], []>} : vector<128x128xbf16>, vector<128x128xbf16>, vector<128x128xf32> -> vector<128x128xf32>
    %c0_11 = arith.constant 0 : index
    %c0_12 = arith.constant 0 : index
    %14 = vector.load %arg6[%c0_11, %c0_12] : memref<1x128xf32, #tpu.memory_space<vmem>>, vector<1x128xf32>
    %15 = vector.broadcast %14 : vector<1x128xf32> to vector<128x128xf32>
    %16 = arith.addf %13, %15 : vector<128x128xf32>
    %c0_13 = arith.constant 0 : index
    %c0_14 = arith.constant 0 : index
    %17 = vector.load %arg7[%c0_13, %c0_14] : memref<128x128xf32, #tpu.memory_space<vmem>>, vector<128x128xf32>
    tpu.vector_store %arg7[%c0_13, %c0_14], %16 {strides = array<i32>} : memref<128x128xf32, #tpu.memory_space<vmem>>, vector<128x128xf32>,
    return
  }
  func.func @transform_0(%arg0: i32) -> (i32, i32) {
    %c0_i32 = arith.constant 0 : i32
    %c0_i32_0 = arith.constant 0 : i32
    return %arg0, %c0_i32 : i32, i32
  }
  func.func @transform_1(%arg0: i32) -> (i32, i32) {
    %c0_i32 = arith.constant 0 : i32
    %c0_i32_0 = arith.constant 0 : i32
    %c0_i32_1 = arith.constant 0 : i32
    return %c0_i32, %c0_i32_0 : i32, i32
  }
  func.func @transform_2(%arg0: i32) -> (i32, i32) {
    %c0_i32 = arith.constant 0 : i32
    %c0_i32_0 = arith.constant 0 : i32
    %c0_i32_1 = arith.constant 0 : i32
    return %c0_i32, %c0_i32_0 : i32, i32
  }
  func.func @transform_3(%arg0: i32) -> (i32, i32) {
    %c0_i32 = arith.constant 0 : i32
    %c0_i32_0 = arith.constant 0 : i32
    %c0_i32_1 = arith.constant 0 : i32
    return %c0_i32, %c0_i32_0 : i32, i32
  }
  func.func @transform_4(%arg0: i32) -> (i32, i32) {
    %c0_i32 = arith.constant 0 : i32
    %c0_i32_0 = arith.constant 0 : i32
    %c0_i32_1 = arith.constant 0 : i32
    return %c0_i32, %c0_i32_0 : i32, i32
  }
  func.func @transform_5(%arg0: i32) -> (i32, i32) {
    %c0_i32 = arith.constant 0 : i32
    %c0_i32_0 = arith.constant 0 : i32
    %c0_i32_1 = arith.constant 0 : i32
    return %c0_i32, %c0_i32_0 : i32, i32
  }
  func.func @transform_6(%arg0: i32) -> (i32, i32) {
    %c0_i32 = arith.constant 0 : i32
    %c0_i32_0 = arith.constant 0 : i32
    return %arg0, %c0_i32 : i32, i32
  }
}

</mosaic_0001>

<llo_original>
// kernel: mlp_forward.3
$region0: #{mlp_forward.3}
  #allocation0 [shape = 'u32[]', space=smem, size = 0x4, offset = 0x4, fixed_abs, tag = 'smem constant byte address 0x4 - core index']
  #allocation1 [shape = 'u32[144,128]{1,0:T(1,128)}', space=vmem, size = 0x12000, scoped, tag = 'internal scratch']
  %s0 = inlined_call_operand.vmem [shape: bf16[384,128], index: 0, kind: input, shape index: {}]
  %s1 = inlined_call_operand.vmem [shape: bf16[128,128], index: 1, kind: input, shape index: {}]
  %s2 = inlined_call_operand.vmem [shape: f32[1,128], index: 2, kind: input, shape index: {}]
  %s3 = inlined_call_operand.vmem [shape: f32[1,128], index: 3, kind: input, shape index: {}]
  %s4 = inlined_call_operand.vmem [shape: bf16[128,128], index: 4, kind: input, shape index: {}]
  %s5 = inlined_call_operand.vmem [shape: f32[1,128], index: 5, kind: input, shape index: {}]
  %s6 = inlined_call_operand.vmem [shape: f32[384,128], index: 6, kind: output, shape index: {}]
  %s7 = sld [smem:[#allocation0]]
  $region57: #{mlp_forward.3} parent=0
    _
  %s9 = ssub.s32 1, %s7
  %s10 = scalar_select 0, %s9, %s7
  loop: start=0, step=1, limit=5
  $region2: #{mlp_forward.3} parent=0 // loop_pre_header
    _
  $region3: #{mlp_forward.3} parent=0 // loop_header
    %s12 = sphi 0, %s16
    %p13 = scmp.ge.s32.totalorder %s12, 5
    %s22 = sphi 0, %s24
    %s25 = sphi 0, %s22
    %s26 = sphi 0, %s25
    %s42 = sphi 0, %s26
    %s46 = sphi 0, %s46
    %s48 = sphi 0, %s46
    %s49 = sphi 0, %s48
    %s63 = sphi 0, %s49
    %s67 = sphi 0, %s67
    %s69 = sphi 0, %s67
    %s70 = sphi 0, %s69
    %s84 = sphi 0, %s70
    %s88 = sphi 0, %s88
    %s90 = sphi 0, %s88
    %s91 = sphi 0, %s90
    %s105 = sphi 0, %s91
    %s109 = sphi 0, %s109
    %s111 = sphi 0, %s109
    %s112 = sphi 0, %s111
    %s126 = sphi 0, %s112
    %s130 = sphi 0, %s130
    %s132 = sphi 0, %s130
    %s133 = sphi 0, %s132
    %s147 = sphi 0, %s133
    %s153 = sphi 0, %s155
    %s156 = sphi 0, %s153
    %s157 = sphi 0, %s156
    %s173 = sphi 0, %s157
  $region4: #{mlp_forward.3} parent=0 // loop_header_branch
    %15 = sbr.rel (%p13) target = $region8
  $region5: #{mlp_forward.3} parent=0 // loop_body
    %s17 = ssub.s32 %s12, 1
    %s18 = ssub.s32 %s12, 2
    %s19 = sadd.s32 %s12, 1
    %s20 = ssub.s32 %s12, %s19
    %p21 = scmp.eq.s32.totalorder %s20, 0
    %s23 = sadd.s32 %s22, 1
    %s24 = scalar_select %p21, %s22, %s23
    %p27 = pneg %p21
    %p28 = scmp.eq.s32.totalorder %s12, 2
    %p29 = por %p27, %p28
    %p30 = scmp.ne.s32.totalorder %s22, %s25
    %p31 = scmp.eq.s32.totalorder %s12, 0
    %p32 = por %p30, %p31
    %p33 = scmp.ne.s32.totalorder %s22, %s25
    %p34 = scmp.eq.s32.totalorder %s17, 2
    %p35 = por %p33, %p34
    %p36 = scmp.ne.s32.totalorder %s25, %s26
    %p37 = scmp.eq.s32.totalorder %s17, 0
    %p38 = por %p36, %p37
    %p39 = scmp.ne.s32.totalorder %s25, %s26
    %p40 = scmp.eq.s32.totalorder %s18, 2
    %p41 = por %p39, %p40
    %p43 = scmp.ne.s32.totalorder %s26, %s42
    %p44 = scmp.eq.s32.totalorder %s18, 0
    %p45 = por %p43, %p44
    %s47 = sadd.s32 %s46, 1
    %p50 = scmp.eq.s32.totalorder %s12, 2
    %p51 = scmp.ne.s32.totalorder %s46, %s48
    %p52 = scmp.eq.s32.totalorder %s12, 0
    %p53 = por %p51, %p52
    %p54 = scmp.ne.s32.totalorder %s46, %s48
    %p55 = scmp.eq.s32.totalorder %s17, 2
    %p56 = por %p54, %p55
    %p57 = scmp.ne.s32.totalorder %s48, %s49
    %p58 = scmp.eq.s32.totalorder %s17, 0
    %p59 = por %p57, %p58
    %p60 = scmp.ne.s32.totalorder %s48, %s49
    %p61 = scmp.eq.s32.totalorder %s18, 2
    %p62 = por %p60, %p61
    %p64 = scmp.ne.s32.totalorder %s49, %s63
    %p65 = scmp.eq.s32.totalorder %s18, 0
    %p66 = por %p64, %p65
    %s68 = sadd.s32 %s67, 1
    %p71 = scmp.eq.s32.totalorder %s12, 2
    %p72 = scmp.ne.s32.totalorder %s67, %s69
    %p73 = scmp.eq.s32.totalorder %s12, 0
    %p74 = por %p72, %p73
    %p75 = scmp.ne.s32.totalorder %s67, %s69
    %p76 = scmp.eq.s32.totalorder %s17, 2
    %p77 = por %p75, %p76
    %p78 = scmp.ne.s32.totalorder %s69, %s70
    %p79 = scmp.eq.s32.totalorder %s17, 0
    %p80 = por %p78, %p79
    %p81 = scmp.ne.s32.totalorder %s69, %s70
    %p82 = scmp.eq.s32.totalorder %s18, 2
    %p83 = por %p81, %p82
    %p85 = scmp.ne.s32.totalorder %s70, %s84
    %p86 = scmp.eq.s32.totalorder %s18, 0
    %p87 = por %p85, %p86
    %s89 = sadd.s32 %s88, 1
    %p92 = scmp.eq.s32.totalorder %s12, 2
    %p93 = scmp.ne.s32.totalorder %s88, %s90
    %p94 = scmp.eq.s32.totalorder %s12, 0
    %p95 = por %p93, %p94
    %p96 = scmp.ne.s32.totalorder %s88, %s90
    %p97 = scmp.eq.s32.totalorder %s17, 2
    %p98 = por %p96, %p97
    %p99 = scmp.ne.s32.totalorder %s90, %s91
    %p100 = scmp.eq.s32.totalorder %s17, 0
    %p101 = por %p99, %p100
    %p102 = scmp.ne.s32.totalorder %s90, %s91
    %p103 = scmp.eq.s32.totalorder %s18, 2
    %p104 = por %p102, %p103
    %p106 = scmp.ne.s32.totalorder %s91, %s105
    %p107 = scmp.eq.s32.totalorder %s18, 0
    %p108 = por %p106, %p107
    %s110 = sadd.s32 %s109, 1
    %p113 = scmp.eq.s32.totalorder %s12, 2
    %p114 = scmp.ne.s32.totalorder %s109, %s111
    %p115 = scmp.eq.s32.totalorder %s12, 0
    %p116 = por %p114, %p115
    %p117 = scmp.ne.s32.totalorder %s109, %s111
    %p118 = scmp.eq.s32.totalorder %s17, 2
    %p119 = por %p117, %p118
    %p120 = scmp.ne.s32.totalorder %s111, %s112
    %p121 = scmp.eq.s32.totalorder %s17, 0
    %p122 = por %p120, %p121
    %p123 = scmp.ne.s32.totalorder %s111, %s112
    %p124 = scmp.eq.s32.totalorder %s18, 2
    %p125 = por %p123, %p124
    %p127 = scmp.ne.s32.totalorder %s112, %s126
    %p128 = scmp.eq.s32.totalorder %s18, 0
    %p129 = por %p127, %p128
    %s131 = sadd.s32 %s130, 1
    %p134 = scmp.eq.s32.totalorder %s12, 2
    %p135 = scmp.ne.s32.totalorder %s130, %s132
    %p136 = scmp.eq.s32.totalorder %s12, 0
    %p137 = por %p135, %p136
    %p138 = scmp.ne.s32.totalorder %s130, %s132
    %p139 = scmp.eq.s32.totalorder %s17, 2
    %p140 = por %p138, %p139
    %p141 = scmp.ne.s32.totalorder %s132, %s133
    %p142 = scmp.eq.s32.totalorder %s17, 0
    %p143 = por %p141, %p142
    %p144 = scmp.ne.s32.totalorder %s132, %s133
    %p145 = scmp.eq.s32.totalorder %s18, 2
    %p146 = por %p144, %p145
    %p148 = scmp.ne.s32.totalorder %s133, %s147
    %p149 = scmp.eq.s32.totalorder %s18, 0
    %p150 = por %p148, %p149
    %s151 = ssub.s32 %s12, %s19
    %p152 = scmp.eq.s32.totalorder %s151, 0
    %s154 = sadd.s32 %s153, 1
    %s155 = scalar_select %p152, %s153, %s154
    %p158 = pneg %p152
    %p159 = scmp.eq.s32.totalorder %s12, 2
    %p160 = por %p158, %p159
    %p161 = scmp.ne.s32.totalorder %s153, %s156
    %p162 = scmp.eq.s32.totalorder %s12, 0
    %p163 = por %p161, %p162
    %p164 = scmp.ne.s32.totalorder %s153, %s156
    %p165 = scmp.eq.s32.totalorder %s17, 2
    %p166 = por %p164, %p165
    %p167 = scmp.ne.s32.totalorder %s156, %s157
    %p168 = scmp.eq.s32.totalorder %s17, 0
    %p169 = por %p167, %p168
    %p170 = scmp.ne.s32.totalorder %s156, %s157
    %p171 = scmp.eq.s32.totalorder %s18, 2
    %p172 = por %p170, %p171
    %p174 = scmp.ne.s32.totalorder %s157, %s173
    %p175 = scmp.eq.s32.totalorder %s18, 0
    %p176 = por %p174, %p175
    %p177 = scmp.le.s32.totalorder 1, %s12
    %p178 = scmp.lt.s32.totalorder %s12, 4
    %p179 = pnand %p177, %p178
    %p180 = pneg %p179
    // Predicated region
    $region9: #{mlp_forward.3} parent=5 // pred_check
      _
    $region10: #{mlp_forward.3} parent=5 // pred_check_branch
      %182 = sbr.rel (%p179) target = $region12
    $region11: #{mlp_forward.3} parent=5 // pred_region
      %s183 = ssub.s32 %s12, 1
      // Predicated region
      $region13: #{mlp_forward.3} parent=11 // pred_check
        %p184 = pneg %p59
      $region14: #{mlp_forward.3} parent=11 // pred_check_branch
        %186 = sbr.rel (%p184) target = $region16
      $region15: #{mlp_forward.3} parent=11 // pred_region
        _
      $region16: #{mlp_forward.3} parent=11 // pred_fallthru
        _
      // Predicated region
      $region17: #{mlp_forward.3} parent=11 // pred_check
        %p187 = pneg %p80
      $region18: #{mlp_forward.3} parent=11 // pred_check_branch
        %189 = sbr.rel (%p187) target = $region20
      $region19: #{mlp_forward.3} parent=11 // pred_region
        _
      $region20: #{mlp_forward.3} parent=11 // pred_fallthru
        _
      // Predicated region
      $region21: #{mlp_forward.3} parent=11 // pred_check
        %p190 = pneg %p101
      $region22: #{mlp_forward.3} parent=11 // pred_check_branch
        %192 = sbr.rel (%p190) target = $region24
      $region23: #{mlp_forward.3} parent=11 // pred_region
        _
      $region24: #{mlp_forward.3} parent=11 // pred_fallthru
        _
      // Predicated region
      $region25: #{mlp_forward.3} parent=11 // pred_check
        %p193 = pneg %p122
      $region26: #{mlp_forward.3} parent=11 // pred_check_branch
        %195 = sbr.rel (%p193) target = $region28
      $region27: #{mlp_forward.3} parent=11 // pred_region
        _
      $region28: #{mlp_forward.3} parent=11 // pred_fallthru
        _
      // Predicated region
      $region29: #{mlp_forward.3} parent=11 // pred_check
        %p196 = pneg %p143
      $region30: #{mlp_forward.3} parent=11 // pred_check_branch
        %198 = sbr.rel (%p196) target = $region32
      $region31: #{mlp_forward.3} parent=11 // pred_region
        _
      $region32: #{mlp_forward.3} parent=11 // pred_fallthru
        _
    $region12: #{mlp_forward.3} parent=5 // pred_fallthru
      _
    %p199 = scmp.lt.s32.totalorder %s12, 3
    // Predicated region
    $region33: #{mlp_forward.3} parent=5 // pred_check
      %p200 = pneg %p199
    $region34: #{mlp_forward.3} parent=5 // pred_check_branch
      %202 = sbr.rel (%p200) target = $region36
    $region35: #{mlp_forward.3} parent=5 // pred_region
      // Predicated region
      $region37: #{mlp_forward.3} parent=35 // pred_check
        %p203 = pneg %p32
      $region38: #{mlp_forward.3} parent=35 // pred_check_branch
        %205 = sbr.rel (%p203) target = $region40
      $region39: #{mlp_forward.3} parent=35 // pred_region
        %s206 = smul.u32 16, %s12
        %p207 = scmp.lt.s32.totalorder %s206, 47
        %s208 = scalar_select %p207, %s206, 47
        %s209 = smul.addr %s208, 4
        %s210 = scalar_lea.vmem %s0, %s209
        %s211 = smul.u32 16, %s12
      $region40: #{mlp_forward.3} parent=35 // pred_fallthru
        _
    $region36: #{mlp_forward.3} parent=5 // pred_fallthru
      _
    %p212 = scmp.le.s32.totalorder 1, %s12
    %p213 = scmp.lt.s32.totalorder %s12, 4
    %p214 = pnand %p212, %p213
    %p215 = pneg %p214
    // Predicated region
    $region41: #{mlp_forward.3} parent=5 // pred_check
      _
    $region42: #{mlp_forward.3} parent=5 // pred_check_branch
      %217 = sbr.rel (%p214) target = $region44
    $region43: #{mlp_forward.3} parent=5 // pred_region
      %s218 = ssub.s32 %s12, 1
      %s219 = smul.u32 16, %s17
      %p220 = scmp.lt.s32.totalorder %s219, 47
      %s221 = scalar_select %p220, %s219, 47
      %s222 = smul.addr %s221, 4
      %s223 = scalar_lea.vmem %s0, %s222
      %p224 = pneg %p38
      %p225 = pneg %p35
      %p226 = pneg %p59
      %p227 = pneg %p56
      %p228 = pneg %p80
      %p229 = pneg %p77
      %p230 = pneg %p101
      %p231 = pneg %p98
      %p232 = pneg %p122
      %p233 = pneg %p119
      %p234 = pneg %p143
      %p235 = pneg %p140
      %p236 = pneg %p169
      %p237 = pneg %p166
      %s238 = smul.u32 16, %s17
      %p239 = scmp.lt.s32.totalorder %s238, 47
      %s240 = scalar_select %p239, %s238, 47
      %s241 = smul.addr %s240, 8
      %s242 = scalar_lea.vmem %s6, %s241
      %s243 = smul.u32 16, %s17
      %p244 = scmp.lt.s32.totalorder %s243, 47
      %s245 = scalar_select %p244, %s243, 47
      %s246 = smul.addr %s245, 4
      %s247 = scalar_lea.vmem %s0, %s246
      %s248 = smul.u32 16, %s17
      %s249 = smul.u32 16, %s17
      %p250 = scmp.lt.s32.totalorder %s249, 47
      %s251 = scalar_select %p250, %s249, 47
      %s252 = smul.addr %s251, 8
      %s253 = scalar_lea.vmem %s6, %s252
      %s254 = smul.u32 16, %s17
      %v256 = vld [vmem:[%s247] sm:$0xf]
      %v257 = vld [vmem:[%s247 + $0x4] sm:$0xf]
      %v258 = vld [vmem:[%s247 + $0x8] sm:$0xf]
      %v259 = vld [vmem:[%s247 + $0xc] sm:$0xf]
      %v260 = vld [vmem:[%s247 + $0x10] sm:$0xf]
      %v261 = vld [vmem:[%s247 + $0x14] sm:$0xf]
      %v262 = vld [vmem:[%s247 + $0x18] sm:$0xf]
      %v263 = vld [vmem:[%s247 + $0x1c] sm:$0xf]
      %v264 = vld [vmem:[%s247 + $0x20] sm:$0xf]
      %v265 = vld [vmem:[%s247 + $0x24] sm:$0xf]
      %v266 = vld [vmem:[%s247 + $0x28] sm:$0xf]
      %v267 = vld [vmem:[%s247 + $0x2c] sm:$0xf]
      %v268 = vld [vmem:[%s247 + $0x30] sm:$0xf]
      %v269 = vld [vmem:[%s247 + $0x34] sm:$0xf]
      %v270 = vld [vmem:[%s247 + $0x38] sm:$0xf]
      %v271 = vld [vmem:[%s247 + $0x3c] sm:$0xf]
      %v272 = vld [vmem:[%s1] sm:$0xf]
      %v273 = vld [vmem:[%s1 + $0x4] sm:$0xf]
      %v274 = vld [vmem:[%s1 + $0x8] sm:$0xf]
      %v275 = vld [vmem:[%s1 + $0xc] sm:$0xf]
      %v276 = vld [vmem:[%s1 + $0x10] sm:$0xf]
      %v277 = vld [vmem:[%s1 + $0x14] sm:$0xf]
      %v278 = vld [vmem:[%s1 + $0x18] sm:$0xf]
      %v279 = vld [vmem:[%s1 + $0x1c] sm:$0xf]
      %v280 = vld [vmem:[%s1 + $0x20] sm:$0xf]
      %v281 = vld [vmem:[%s1 + $0x24] sm:$0xf]
      %v282 = vld [vmem:[%s1 + $0x28] sm:$0xf]
      %v283 = vld [vmem:[%s1 + $0x2c] sm:$0xf]
      %v284 = vld [vmem:[%s1 + $0x30] sm:$0xf]
      %v285 = vld [vmem:[%s1 + $0x34] sm:$0xf]
      %v286 = vld [vmem:[%s1 + $0x38] sm:$0xf]
      %v287 = vld [vmem:[%s1 + $0x3c] sm:$0xf]
      %v304 = vunpack.c.l.b16 %v256
      %v305 = vunpack.c.l.b16 %v257
      %v306 = vunpack.c.l.b16 %v258
      %v307 = vunpack.c.l.b16 %v259
      %v308 = vunpack.c.l.b16 %v260
      %v309 = vunpack.c.l.b16 %v261
      %v310 = vunpack.c.l.b16 %v262
      %v311 = vunpack.c.l.b16 %v263
      %v312 = vunpack.c.l.b16 %v264
      %v313 = vunpack.c.l.b16 %v265
      %v314 = vunpack.c.l.b16 %v266
      %v315 = vunpack.c.l.b16 %v267
      %v316 = vunpack.c.l.b16 %v268
      %v317 = vunpack.c.l.b16 %v269
      %v318 = vunpack.c.l.b16 %v270
      %v319 = vunpack.c.l.b16 %v271
      %v320 = vpack.c.b16 %v305, %v304
      %v321 = vpack.c.b16 %v307, %v306
      %v322 = vpack.c.b16 %v309, %v308
      %v323 = vpack.c.b16 %v311, %v310
      %v324 = vpack.c.b16 %v313, %v312
      %v325 = vpack.c.b16 %v315, %v314
      %v326 = vpack.c.b16 %v317, %v316
      %v327 = vpack.c.b16 %v319, %v318
      %v352 = vunpack.c.l.b16 %v272
      %v353 = vunpack.c.l.b16 %v273
      %v354 = vunpack.c.l.b16 %v274
      %v355 = vunpack.c.l.b16 %v275
      %v356 = vunpack.c.l.b16 %v276
      %v357 = vunpack.c.l.b16 %v277
      %v358 = vunpack.c.l.b16 %v278
      %v359 = vunpack.c.l.b16 %v279
      %v360 = vunpack.c.l.b16 %v280
      %v361 = vunpack.c.l.b16 %v281
      %v362 = vunpack.c.l.b16 %v282
      %v363 = vunpack.c.l.b16 %v283
      %v364 = vunpack.c.l.b16 %v284
      %v365 = vunpack.c.l.b16 %v285
      %v366 = vunpack.c.l.b16 %v286
      %v367 = vunpack.c.l.b16 %v287
      %v368 = vpack.c.b16 %v353, %v352
      %v369 = vpack.c.b16 %v355, %v354
      %v370 = vpack.c.b16 %v357, %v356
      %v371 = vpack.c.b16 %v359, %v358
      %v372 = vpack.c.b16 %v361, %v360
      %v373 = vpack.c.b16 %v363, %v362
      %v374 = vpack.c.b16 %v365, %v364
      %v375 = vpack.c.b16 %v367, %v366
      %384 = vmatprep.subr.bf16.mxu0 0
      %385 = vmatpush1.bf16.msra.mxu0 %v375
      %386 = vmatprep.subr.bf16.mxu0 0
      %387 = vmatpush1.bf16.msra.mxu0 %v374
      %388 = vmatprep.subr.bf16.mxu0 0
      %389 = vmatpush1.bf16.msra.mxu0 %v373
      %390 = vmatprep.subr.bf16.mxu0 0
      %391 = vmatpush1.bf16.msra.mxu0 %v372
      %392 = vmatprep.subr.bf16.mxu0 0
      %393 = vmatpush1.bf16.msra.mxu0 %v371
      %394 = vmatprep.subr.bf16.mxu0 0
      %395 = vmatpush1.bf16.msra.mxu0 %v370
      %396 = vmatprep.subr.bf16.mxu0 0
      %397 = vmatpush1.bf16.msra.mxu0 %v369
      %398 = vmatprep.subr.bf16.mxu0 0
      %399 = vmatpush1.bf16.msra.mxu0 %v368
      %400 = vmatprep.subr.bf16.mxu0 0
      %401 = vmatpush2.bf16.msra.mxu0 0
      %402 = vmatprep.subr.bf16.mxu0 0
      %403 = vmatpush2.bf16.msra.mxu0 0
      %404 = vmatprep.subr.bf16.mxu0 0
      %405 = vmatpush2.bf16.msra.mxu0 0
      %406 = vmatprep.subr.bf16.mxu0 0
      %407 = vmatpush2.bf16.msra.mxu0 0
      %408 = vmatprep.subr.bf16.mxu0 0
      %409 = vmatpush2.bf16.msra.mxu0 0
      %410 = vmatprep.subr.bf16.mxu0 0
      %411 = vmatpush2.bf16.msra.mxu0 0
      %412 = vmatprep.subr.bf16.mxu0 0
      %413 = vmatpush2.bf16.msra.mxu0 0
      %414 = vmatprep.subr.bf16.mxu0 0
      %415 = vmatpush2.bf16.msra.mxu0 0
      %416 = vmatprep.mubr.bf16.mxu0 0
      %417 = vmatmul.mubr.bf16.gmra.mxu0 %v320
      %v418 = vpop.f32.mrf.mxu0
      %v419 = vadd.f32 0.0, %v418
      %v420 = vpop.f32.mrf.mxu0
      %v421 = vpop.f32.mrf.mxu0
      %v422 = vadd.f32 0.0, %v421
      %v423 = vpop.f32.mrf.mxu0
      %424 = vmatprep.mubr.bf16.mxu0 0
      %425 = vmatmul.mubr.bf16.gmra.mxu0 %v321
      %v426 = vpop.f32.mrf.mxu0
      %v427 = vadd.f32 0.0, %v426
      %v428 = vpop.f32.mrf.mxu0
      %v429 = vpop.f32.mrf.mxu0
      %v430 = vadd.f32 0.0, %v429
      %v431 = vpop.f32.mrf.mxu0
      %432 = vmatprep.mubr.bf16.mxu0 0
      %433 = vmatmul.mubr.bf16.gmra.mxu0 %v322
      %v434 = vpop.f32.mrf.mxu0
      %v435 = vadd.f32 0.0, %v434
      %v436 = vpop.f32.mrf.mxu0
      %v437 = vpop.f32.mrf.mxu0
      %v438 = vadd.f32 0.0, %v437
      %v439 = vpop.f32.mrf.mxu0
      %440 = vmatprep.mubr.bf16.mxu0 0
      %441 = vmatmul.mubr.bf16.gmra.mxu0 %v323
      %v442 = vpop.f32.mrf.mxu0
      %v443 = vadd.f32 0.0, %v442
      %v444 = vpop.f32.mrf.mxu0
      %v445 = vpop.f32.mrf.mxu0
      %v446 = vadd.f32 0.0, %v445
      %v447 = vpop.f32.mrf.mxu0
      %448 = vmatprep.mubr.bf16.mxu0 0
      %449 = vmatmul.mubr.bf16.gmra.mxu0 %v324
      %v450 = vpop.f32.mrf.mxu0
      %v451 = vadd.f32 0.0, %v450
      %v452 = vpop.f32.mrf.mxu0
      %v453 = vpop.f32.mrf.mxu0
      %v454 = vadd.f32 0.0, %v453
      %v455 = vpop.f32.mrf.mxu0
      %456 = vmatprep.mubr.bf16.mxu0 0
      %457 = vmatmul.mubr.bf16.gmra.mxu0 %v325
      %v458 = vpop.f32.mrf.mxu0
      %v459 = vadd.f32 0.0, %v458
      %v460 = vpop.f32.mrf.mxu0
      %v461 = vpop.f32.mrf.mxu0
      %v462 = vadd.f32 0.0, %v461
      %v463 = vpop.f32.mrf.mxu0
      %464 = vmatprep.mubr.bf16.mxu0 0
      %465 = vmatmul.mubr.bf16.gmra.mxu0 %v326
      %v466 = vpop.f32.mrf.mxu0
      %v467 = vadd.f32 0.0, %v466
      %v468 = vpop.f32.mrf.mxu0
      %v469 = vpop.f32.mrf.mxu0
      %v470 = vadd.f32 0.0, %v469
      %v471 = vpop.f32.mrf.mxu0
      %472 = vmatprep.mubr.bf16.mxu0 0
      %473 = vmatmul.mubr.bf16.gmra.mxu0 %v327
      %v474 = vpop.f32.mrf.mxu0
      %v475 = vadd.f32 0.0, %v474
      %v476 = vpop.f32.mrf.mxu0
      %v477 = vpop.f32.mrf.mxu0
      %v478 = vadd.f32 0.0, %v477
      %v479 = vpop.f32.mrf.mxu0
      %480 = vdwg.mxu0
      %v481 = vld [vmem:[%s2] sm:$0x1]
      %v483 = vlaneseq
      %v484 = vshrl.u32 %v483, 7
      %v485 = vsub.s32 0, %v484
      %v486 = vrot.slane %v481, %v485
      %v488 = vmul.f32 %v419, %v486
      %v489 = vmul.f32 %v422, %v486
      %v490 = vmul.f32 %v427, %v486
      %v491 = vmul.f32 %v430, %v486
      %v492 = vmul.f32 %v435, %v486
      %v493 = vmul.f32 %v438, %v486
      %v494 = vmul.f32 %v443, %v486
      %v495 = vmul.f32 %v446, %v486
      %v496 = vmul.f32 %v451, %v486
      %v497 = vmul.f32 %v454, %v486
      %v498 = vmul.f32 %v459, %v486
      %v499 = vmul.f32 %v462, %v486
      %v500 = vmul.f32 %v467, %v486
      %v501 = vmul.f32 %v470, %v486
      %v502 = vmul.f32 %v475, %v486
      %v503 = vmul.f32 %v478, %v486
      %v504 = vld [vmem:[%s3] sm:$0x1]
      %v506 = vlaneseq
      %v507 = vshrl.u32 %v506, 7
      %v508 = vsub.s32 0, %v507
      %v509 = vrot.slane %v504, %v508
      %v511 = vadd.f32 %v488, %v509
      %v512 = vadd.f32 %v489, %v509
      %v513 = vadd.f32 %v490, %v509
      %v514 = vadd.f32 %v491, %v509
      %v515 = vadd.f32 %v492, %v509
      %v516 = vadd.f32 %v493, %v509
      %v517 = vadd.f32 %v494, %v509
      %v518 = vadd.f32 %v495, %v509
      %v519 = vadd.f32 %v496, %v509
      %v520 = vadd.f32 %v497, %v509
      %v521 = vadd.f32 %v498, %v509
      %v522 = vadd.f32 %v499, %v509
      %v523 = vadd.f32 %v500, %v509
      %v524 = vadd.f32 %v501, %v509
      %v525 = vadd.f32 %v502, %v509
      %v526 = vadd.f32 %v503, %v509
      %v527 = vmax.f32 %v511, 0.0
      %v528 = vmax.f32 %v512, 0.0
      %v529 = vmax.f32 %v513, 0.0
      %v530 = vmax.f32 %v514, 0.0
      %v531 = vmax.f32 %v515, 0.0
      %v532 = vmax.f32 %v516, 0.0
      %v533 = vmax.f32 %v517, 0.0
      %v534 = vmax.f32 %v518, 0.0
      %v535 = vmax.f32 %v519, 0.0
      %v536 = vmax.f32 %v520, 0.0
      %v537 = vmax.f32 %v521, 0.0
      %v538 = vmax.f32 %v522, 0.0
      %v539 = vmax.f32 %v523, 0.0
      %v540 = vmax.f32 %v524, 0.0
      %v541 = vmax.f32 %v525, 0.0
      %v542 = vmax.f32 %v526, 0.0
      %v543 = vpack.c.bf16 %v528, %v527
      %v544 = vpack.c.bf16 %v530, %v529
      %v545 = vpack.c.bf16 %v532, %v531
      %v546 = vpack.c.bf16 %v534, %v533
      %v547 = vpack.c.bf16 %v536, %v535
      %v548 = vpack.c.bf16 %v538, %v537
      %v549 = vpack.c.bf16 %v540, %v539
      %v550 = vpack.c.bf16 %v542, %v541
      %v551 = vld [vmem:[%s4] sm:$0xf]
      %v552 = vld [vmem:[%s4 + $0x4] sm:$0xf]
      %v553 = vld [vmem:[%s4 + $0x8] sm:$0xf]
      %v554 = vld [vmem:[%s4 + $0xc] sm:$0xf]
      %v555 = vld [vmem:[%s4 + $0x10] sm:$0xf]
      %v556 = vld [vmem:[%s4 + $0x14] sm:$0xf]
      %v557 = vld [vmem:[%s4 + $0x18] sm:$0xf]
      %v558 = vld [vmem:[%s4 + $0x1c] sm:$0xf]
      %v559 = vld [vmem:[%s4 + $0x20] sm:$0xf]
      %v560 = vld [vmem:[%s4 + $0x24] sm:$0xf]
      %v561 = vld [vmem:[%s4 + $0x28] sm:$0xf]
      %v562 = vld [vmem:[%s4 + $0x2c] sm:$0xf]
      %v563 = vld [vmem:[%s4 + $0x30] sm:$0xf]
      %v564 = vld [vmem:[%s4 + $0x34] sm:$0xf]
      %v565 = vld [vmem:[%s4 + $0x38] sm:$0xf]
      %v566 = vld [vmem:[%s4 + $0x3c] sm:$0xf]
      %v567 = vld [vmem:[%s5] sm:$0x1]
      %v569 = vlaneseq
      %v570 = vshrl.u32 %v569, 7
      %v571 = vsub.s32 0, %v570
      %v572 = vrot.slane %v567, %v571
      %v590 = vunpack.c.l.b16 %v551
      %v591 = vunpack.c.l.b16 %v552
      %v592 = vunpack.c.l.b16 %v553
      %v593 = vunpack.c.l.b16 %v554
      %v594 = vunpack.c.l.b16 %v555
      %v595 = vunpack.c.l.b16 %v556
      %v596 = vunpack.c.l.b16 %v557
      %v597 = vunpack.c.l.b16 %v558
      %v598 = vunpack.c.l.b16 %v559
      %v599 = vunpack.c.l.b16 %v560
      %v600 = vunpack.c.l.b16 %v561
      %v601 = vunpack.c.l.b16 %v562
      %v602 = vunpack.c.l.b16 %v563
      %v603 = vunpack.c.l.b16 %v564
      %v604 = vunpack.c.l.b16 %v565
      %v605 = vunpack.c.l.b16 %v566
      %v606 = vpack.c.b16 %v591, %v590
      %v607 = vpack.c.b16 %v593, %v592
      %v608 = vpack.c.b16 %v595, %v594
      %v609 = vpack.c.b16 %v597, %v596
      %v610 = vpack.c.b16 %v599, %v598
      %v611 = vpack.c.b16 %v601, %v600
      %v612 = vpack.c.b16 %v603, %v602
      %v613 = vpack.c.b16 %v605, %v604
      %622 = vmatprep.subr.bf16.mxu0 0
      %623 = vmatpush1.bf16.msra.mxu0 %v613
      %624 = vmatprep.subr.bf16.mxu0 0
      %625 = vmatpush1.bf16.msra.mxu0 %v612
      %626 = vmatprep.subr.bf16.mxu0 0
      %627 = vmatpush1.bf16.msra.mxu0 %v611
      %628 = vmatprep.subr.bf16.mxu0 0
      %629 = vmatpush1.bf16.msra.mxu0 %v610
      %630 = vmatprep.subr.bf16.mxu0 0
      %631 = vmatpush1.bf16.msra.mxu0 %v609
      %632 = vmatprep.subr.bf16.mxu0 0
      %633 = vmatpush1.bf16.msra.mxu0 %v608
      %634 = vmatprep.subr.bf16.mxu0 0
      %635 = vmatpush1.bf16.msra.mxu0 %v607
      %636 = vmatprep.subr.bf16.mxu0 0
      %637 = vmatpush1.bf16.msra.mxu0 %v606
      %638 = vmatprep.subr.bf16.mxu0 0
      %639 = vmatpush2.bf16.msra.mxu0 0
      %640 = vmatprep.subr.bf16.mxu0 0
      %641 = vmatpush2.bf16.msra.mxu0 0
      %642 = vmatprep.subr.bf16.mxu0 0
      %643 = vmatpush2.bf16.msra.mxu0 0
      %644 = vmatprep.subr.bf16.mxu0 0
      %645 = vmatpush2.bf16.msra.mxu0 0
      %646 = vmatprep.subr.bf16.mxu0 0
      %647 = vmatpush2.bf16.msra.mxu0 0
      %648 = vmatprep.subr.bf16.mxu0 0
      %649 = vmatpush2.bf16.msra.mxu0 0
      %650 = vmatprep.subr.bf16.mxu0 0
      %651 = vmatpush2.bf16.msra.mxu0 0
      %652 = vmatprep.subr.bf16.mxu0 0
      %653 = vmatpush2.bf16.msra.mxu0 0
      %654 = vmatprep.mubr.bf16.mxu0 0
      %655 = vmatmul.mubr.bf16.gmra.mxu0 %v543
      %v656 = vpop.f32.mrf.mxu0
      %v657 = vadd.f32 %v572, %v656
      %v658 = vpop.f32.mrf.mxu0
      %v659 = vpop.f32.mrf.mxu0
      %v660 = vadd.f32 %v572, %v659
      %v661 = vpop.f32.mrf.mxu0
      %662 = vmatprep.mubr.bf16.mxu0 0
      %663 = vmatmul.mubr.bf16.gmra.mxu0 %v544
      %v664 = vpop.f32.mrf.mxu0
      %v665 = vadd.f32 %v572, %v664
      %v666 = vpop.f32.mrf.mxu0
      %v667 = vpop.f32.mrf.mxu0
      %v668 = vadd.f32 %v572, %v667
      %v669 = vpop.f32.mrf.mxu0
      %670 = vmatprep.mubr.bf16.mxu0 0
      %671 = vmatmul.mubr.bf16.gmra.mxu0 %v545
      %v672 = vpop.f32.mrf.mxu0
      %v673 = vadd.f32 %v572, %v672
      %v674 = vpop.f32.mrf.mxu0
      %v675 = vpop.f32.mrf.mxu0
      %v676 = vadd.f32 %v572, %v675
      %v677 = vpop.f32.mrf.mxu0
      %678 = vmatprep.mubr.bf16.mxu0 0
      %679 = vmatmul.mubr.bf16.gmra.mxu0 %v546
      %v680 = vpop.f32.mrf.mxu0
      %v681 = vadd.f32 %v572, %v680
      %v682 = vpop.f32.mrf.mxu0
      %v683 = vpop.f32.mrf.mxu0
      %v684 = vadd.f32 %v572, %v683
      %v685 = vpop.f32.mrf.mxu0
      %686 = vmatprep.mubr.bf16.mxu0 0
      %687 = vmatmul.mubr.bf16.gmra.mxu0 %v547
      %v688 = vpop.f32.mrf.mxu0
      %v689 = vadd.f32 %v572, %v688
      %v690 = vpop.f32.mrf.mxu0
      %v691 = vpop.f32.mrf.mxu0
      %v692 = vadd.f32 %v572, %v691
      %v693 = vpop.f32.mrf.mxu0
      %694 = vmatprep.mubr.bf16.mxu0 0
      %695 = vmatmul.mubr.bf16.gmra.mxu0 %v548
      %v696 = vpop.f32.mrf.mxu0
      %v697 = vadd.f32 %v572, %v696
      %v698 = vpop.f32.mrf.mxu0
      %v699 = vpop.f32.mrf.mxu0
      %v700 = vadd.f32 %v572, %v699
      %v701 = vpop.f32.mrf.mxu0
      %702 = vmatprep.mubr.bf16.mxu0 0
      %703 = vmatmul.mubr.bf16.gmra.mxu0 %v549
      %v704 = vpop.f32.mrf.mxu0
      %v705 = vadd.f32 %v572, %v704
      %v706 = vpop.f32.mrf.mxu0
      %v707 = vpop.f32.mrf.mxu0
      %v708 = vadd.f32 %v572, %v707
      %v709 = vpop.f32.mrf.mxu0
      %710 = vmatprep.mubr.bf16.mxu0 0
      %711 = vmatmul.mubr.bf16.gmra.mxu0 %v550
      %v712 = vpop.f32.mrf.mxu0
      %v713 = vadd.f32 %v572, %v712
      %v714 = vpop.f32.mrf.mxu0
      %v715 = vpop.f32.mrf.mxu0
      %v716 = vadd.f32 %v572, %v715
      %v717 = vpop.f32.mrf.mxu0
      %718 = vdwg.mxu0
      %719 = vst [vmem:[%s253] sm:$0xff] %v657
      %720 = vst [vmem:[%s253 + $0x8] sm:$0xff] %v660
      %721 = vst [vmem:[%s253 + $0x10] sm:$0xff] %v665
      %722 = vst [vmem:[%s253 + $0x18] sm:$0xff] %v668
      %723 = vst [vmem:[%s253 + $0x20] sm:$0xff] %v673
      %724 = vst [vmem:[%s253 + $0x28] sm:$0xff] %v676
      %725 = vst [vmem:[%s253 + $0x30] sm:$0xff] %v681
      %726 = vst [vmem:[%s253 + $0x38] sm:$0xff] %v684
      %727 = vst [vmem:[%s253 + $0x40] sm:$0xff] %v689
      %728 = vst [vmem:[%s253 + $0x48] sm:$0xff] %v692
      %729 = vst [vmem:[%s253 + $0x50] sm:$0xff] %v697
      %730 = vst [vmem:[%s253 + $0x58] sm:$0xff] %v700
      %731 = vst [vmem:[%s253 + $0x60] sm:$0xff] %v705
      %732 = vst [vmem:[%s253 + $0x68] sm:$0xff] %v708
      %733 = vst [vmem:[%s253 + $0x70] sm:$0xff] %v713
      %734 = vst [vmem:[%s253 + $0x78] sm:$0xff] %v716
      %s735 = smul.u32 16, %s17
      %p736 = scmp.lt.s32.totalorder %s735, 47
      %s737 = scalar_select %p736, %s735, 47
      %s738 = smul.addr %s737, 8
      %s739 = scalar_lea.vmem %s6, %s738
      // Predicated region
      $region45: #{mlp_forward.3} parent=43 // pred_check
        %p740 = pneg %p166
      $region46: #{mlp_forward.3} parent=43 // pred_check_branch
        %742 = sbr.rel (%p740) target = $region48
      $region47: #{mlp_forward.3} parent=43 // pred_region
        %s743 = smul.u32 16, %s17
      $region48: #{mlp_forward.3} parent=43 // pred_fallthru
        _
    $region44: #{mlp_forward.3} parent=5 // pred_fallthru
      _
    %p744 = scmp.le.s32.totalorder 2, %s12
    // Predicated region
    $region49: #{mlp_forward.3} parent=5 // pred_check
      %p745 = pneg %p744
    $region50: #{mlp_forward.3} parent=5 // pred_check_branch
      %747 = sbr.rel (%p745) target = $region52
    $region51: #{mlp_forward.3} parent=5 // pred_region
      %s748 = ssub.s32 %s12, 2
      // Predicated region
      $region53: #{mlp_forward.3} parent=51 // pred_check
        %p749 = pneg %p172
      $region54: #{mlp_forward.3} parent=51 // pred_check_branch
        %751 = sbr.rel (%p749) target = $region56
      $region55: #{mlp_forward.3} parent=51 // pred_region
        %s752 = smul.u32 16, %s18
        %p753 = scmp.lt.s32.totalorder %s752, 47
        %s754 = scalar_select %p753, %s752, 47
        %s755 = smul.addr %s754, 8
        %s756 = scalar_lea.vmem %s6, %s755
      $region56: #{mlp_forward.3} parent=51 // pred_fallthru
        _
    $region52: #{mlp_forward.3} parent=5 // pred_fallthru
      _
  $region6: #{mlp_forward.3} parent=0 // loop_footer
    %s16 = sadd.s32 1, %s12
  $region7: #{mlp_forward.3} parent=0 // loop_footer_branch
    %11 = sbr.rel target = $region3
  $region8: #{mlp_forward.3} parent=0 // loop_exit
    _

// kernel: mlp_forward.2
$region0: #{mlp_forward.2}
  #allocation0 [shape = 'u32[]', space=smem, size = 0x4, offset = 0x4, fixed_abs, tag = 'smem constant byte address 0x4 - core index']
  #allocation1 [shape = 'u32[144,128]{1,0:T(1,128)}', space=vmem, size = 0x12000, scoped, tag = 'internal scratch']
  %s0 = inlined_call_operand.vmem [shape: bf16[384,128], index: 0, kind: input, shape index: {}]
  %s1 = inlined_call_operand.vmem [shape: bf16[128,128], index: 1, kind: input, shape index: {}]
  %s2 = inlined_call_operand.vmem [shape: f32[3,1,128], index: 2, kind: output, shape index: {0}]
  %s3 = inlined_call_operand.vmem [shape: f32[3,1,128], index: 3, kind: output, shape index: {1}]
  %4 = xla_tuple %s2, %s3
  %s5 = sld [smem:[#allocation0]]
  $region49: #{mlp_forward.2} parent=0
    _
  %s7 = ssub.s32 1, %s5
  %s8 = scalar_select 0, %s7, %s5
  loop: start=0, step=1, limit=5
  $region2: #{mlp_forward.2} parent=0 // loop_pre_header
    _
  $region3: #{mlp_forward.2} parent=0 // loop_header
    %s10 = sphi 0, %s14
    %p11 = scmp.ge.s32.totalorder %s10, 5
    %s20 = sphi 0, %s22
    %s23 = sphi 0, %s20
    %s24 = sphi 0, %s23
    %s40 = sphi 0, %s24
    %s44 = sphi 0, %s44
    %s46 = sphi 0, %s44
    %s47 = sphi 0, %s46
    %s61 = sphi 0, %s47
    %s67 = sphi 0, %s69
    %s70 = sphi 0, %s67
    %s71 = sphi 0, %s70
    %s87 = sphi 0, %s71
    %s93 = sphi 0, %s95
    %s96 = sphi 0, %s93
    %s97 = sphi 0, %s96
    %s113 = sphi 0, %s97
  $region4: #{mlp_forward.2} parent=0 // loop_header_branch
    %13 = sbr.rel (%p11) target = $region8
  $region5: #{mlp_forward.2} parent=0 // loop_body
    %s15 = ssub.s32 %s10, 1
    %s16 = ssub.s32 %s10, 2
    %s17 = sadd.s32 %s10, 1
    %s18 = ssub.s32 %s10, %s17
    %p19 = scmp.eq.s32.totalorder %s18, 0
    %s21 = sadd.s32 %s20, 1
    %s22 = scalar_select %p19, %s20, %s21
    %p25 = pneg %p19
    %p26 = scmp.eq.s32.totalorder %s10, 2
    %p27 = por %p25, %p26
    %p28 = scmp.ne.s32.totalorder %s20, %s23
    %p29 = scmp.eq.s32.totalorder %s10, 0
    %p30 = por %p28, %p29
    %p31 = scmp.ne.s32.totalorder %s20, %s23
    %p32 = scmp.eq.s32.totalorder %s15, 2
    %p33 = por %p31, %p32
    %p34 = scmp.ne.s32.totalorder %s23, %s24
    %p35 = scmp.eq.s32.totalorder %s15, 0
    %p36 = por %p34, %p35
    %p37 = scmp.ne.s32.totalorder %s23, %s24
    %p38 = scmp.eq.s32.totalorder %s16, 2
    %p39 = por %p37, %p38
    %p41 = scmp.ne.s32.totalorder %s24, %s40
    %p42 = scmp.eq.s32.totalorder %s16, 0
    %p43 = por %p41, %p42
    %s45 = sadd.s32 %s44, 1
    %p48 = scmp.eq.s32.totalorder %s10, 2
    %p49 = scmp.ne.s32.totalorder %s44, %s46
    %p50 = scmp.eq.s32.totalorder %s10, 0
    %p51 = por %p49, %p50
    %p52 = scmp.ne.s32.totalorder %s44, %s46
    %p53 = scmp.eq.s32.totalorder %s15, 2
    %p54 = por %p52, %p53
    %p55 = scmp.ne.s32.totalorder %s46, %s47
    %p56 = scmp.eq.s32.totalorder %s15, 0
    %p57 = por %p55, %p56
    %p58 = scmp.ne.s32.totalorder %s46, %s47
    %p59 = scmp.eq.s32.totalorder %s16, 2
    %p60 = por %p58, %p59
    %p62 = scmp.ne.s32.totalorder %s47, %s61
    %p63 = scmp.eq.s32.totalorder %s16, 0
    %p64 = por %p62, %p63
    %s65 = ssub.s32 %s10, %s17
    %p66 = scmp.eq.s32.totalorder %s65, 0
    %s68 = sadd.s32 %s67, 1
    %s69 = scalar_select %p66, %s67, %s68
    %p72 = pneg %p66
    %p73 = scmp.eq.s32.totalorder %s10, 2
    %p74 = por %p72, %p73
    %p75 = scmp.ne.s32.totalorder %s67, %s70
    %p76 = scmp.eq.s32.totalorder %s10, 0
    %p77 = por %p75, %p76
    %p78 = scmp.ne.s32.totalorder %s67, %s70
    %p79 = scmp.eq.s32.totalorder %s15, 2
    %p80 = por %p78, %p79
    %p81 = scmp.ne.s32.totalorder %s70, %s71
    %p82 = scmp.eq.s32.totalorder %s15, 0
    %p83 = por %p81, %p82
    %p84 = scmp.ne.s32.totalorder %s70, %s71
    %p85 = scmp.eq.s32.totalorder %s16, 2
    %p86 = por %p84, %p85
    %p88 = scmp.ne.s32.totalorder %s71, %s87
    %p89 = scmp.eq.s32.totalorder %s16, 0
    %p90 = por %p88, %p89
    %s91 = ssub.s32 %s10, %s17
    %p92 = scmp.eq.s32.totalorder %s91, 0
    %s94 = sadd.s32 %s93, 1
    %s95 = scalar_select %p92, %s93, %s94
    %p98 = pneg %p92
    %p99 = scmp.eq.s32.totalorder %s10, 2
    %p100 = por %p98, %p99
    %p101 = scmp.ne.s32.totalorder %s93, %s96
    %p102 = scmp.eq.s32.totalorder %s10, 0
    %p103 = por %p101, %p102
    %p104 = scmp.ne.s32.totalorder %s93, %s96
    %p105 = scmp.eq.s32.totalorder %s15, 2
    %p106 = por %p104, %p105
    %p107 = scmp.ne.s32.totalorder %s96, %s97
    %p108 = scmp.eq.s32.totalorder %s15, 0
    %p109 = por %p107, %p108
    %p110 = scmp.ne.s32.totalorder %s96, %s97
    %p111 = scmp.eq.s32.totalorder %s16, 2
    %p112 = por %p110, %p111
    %p114 = scmp.ne.s32.totalorder %s97, %s113
    %p115 = scmp.eq.s32.totalorder %s16, 0
    %p116 = por %p114, %p115
    %p117 = scmp.le.s32.totalorder 1, %s10
    %p118 = scmp.lt.s32.totalorder %s10, 4
    %p119 = pnand %p117, %p118
    %p120 = pneg %p119
    // Predicated region
    $region9: #{mlp_forward.2} parent=5 // pred_check
      _
    $region10: #{mlp_forward.2} parent=5 // pred_check_branch
      %122 = sbr.rel (%p119) target = $region12
    $region11: #{mlp_forward.2} parent=5 // pred_region
      %s123 = ssub.s32 %s10, 1
      // Predicated region
      $region13: #{mlp_forward.2} parent=11 // pred_check
        %p124 = pneg %p57
      $region14: #{mlp_forward.2} parent=11 // pred_check_branch
        %126 = sbr.rel (%p124) target = $region16
      $region15: #{mlp_forward.2} parent=11 // pred_region
        _
      $region16: #{mlp_forward.2} parent=11 // pred_fallthru
        _
    $region12: #{mlp_forward.2} parent=5 // pred_fallthru
      _
    %p127 = scmp.lt.s32.totalorder %s10, 3
    // Predicated region
    $region17: #{mlp_forward.2} parent=5 // pred_check
      %p128 = pneg %p127
    $region18: #{mlp_forward.2} parent=5 // pred_check_branch
      %130 = sbr.rel (%p128) target = $region20
    $region19: #{mlp_forward.2} parent=5 // pred_region
      // Predicated region
      $region21: #{mlp_forward.2} parent=19 // pred_check
        %p131 = pneg %p30
      $region22: #{mlp_forward.2} parent=19 // pred_check_branch
        %133 = sbr.rel (%p131) target = $region24
      $region23: #{mlp_forward.2} parent=19 // pred_region
        %s134 = smul.u32 16, %s10
        %p135 = scmp.lt.s32.totalorder %s134, 47
        %s136 = scalar_select %p135, %s134, 47
        %s137 = smul.addr %s136, 4
        %s138 = scalar_lea.vmem %s0, %s137
        %s139 = smul.u32 16, %s10
      $region24: #{mlp_forward.2} parent=19 // pred_fallthru
        _
    $region20: #{mlp_forward.2} parent=5 // pred_fallthru
      _
    %p140 = scmp.le.s32.totalorder 1, %s10
    %p141 = scmp.lt.s32.totalorder %s10, 4
    %p142 = pnand %p140, %p141
    %p143 = pneg %p142
    // Predicated region
    $region25: #{mlp_forward.2} parent=5 // pred_check
      _
    $region26: #{mlp_forward.2} parent=5 // pred_check_branch
      %145 = sbr.rel (%p142) target = $region28
    $region27: #{mlp_forward.2} parent=5 // pred_region
      %s146 = ssub.s32 %s10, 1
      %s147 = smul.u32 16, %s15
      %p148 = scmp.lt.s32.totalorder %s147, 47
      %s149 = scalar_select %p148, %s147, 47
      %s150 = smul.addr %s149, 4
      %s151 = scalar_lea.vmem %s0, %s150
      %p152 = pneg %p36
      %p153 = pneg %p33
      %p154 = pneg %p57
      %p155 = pneg %p54
      %p156 = pneg %p83
      %p157 = pneg %p80
      %p158 = scmp.lt.s32.totalorder %s15, 2
      %s159 = scalar_select %p158, %s15, 2
      %s160 = scalar_lea.vmem %s2, %s159
      %p161 = pneg %p109
      %p162 = pneg %p106
      %p163 = scmp.lt.s32.totalorder %s15, 2
      %s164 = scalar_select %p163, %s15, 2
      %s165 = scalar_lea.vmem %s3, %s164
      %s166 = smul.u32 16, %s15
      %p167 = scmp.lt.s32.totalorder %s166, 47
      %s168 = scalar_select %p167, %s166, 47
      %s169 = smul.addr %s168, 4
      %s170 = scalar_lea.vmem %s0, %s169
      %s171 = smul.u32 16, %s15
      %p172 = scmp.lt.s32.totalorder %s15, 2
      %s173 = scalar_select %p172, %s15, 2
      %s174 = scalar_lea.vmem %s2, %s173
      %p175 = scmp.lt.s32.totalorder %s15, 2
      %s176 = scalar_select %p175, %s15, 2
      %s177 = scalar_lea.vmem %s3, %s176
      %v179 = vld [vmem:[%s170] sm:$0xf]
      %v180 = vld [vmem:[%s170 + $0x4] sm:$0xf]
      %v181 = vld [vmem:[%s170 + $0x8] sm:$0xf]
      %v182 = vld [vmem:[%s170 + $0xc] sm:$0xf]
      %v183 = vld [vmem:[%s170 + $0x10] sm:$0xf]
      %v184 = vld [vmem:[%s170 + $0x14] sm:$0xf]
      %v185 = vld [vmem:[%s170 + $0x18] sm:$0xf]
      %v186 = vld [vmem:[%s170 + $0x1c] sm:$0xf]
      %v187 = vld [vmem:[%s170 + $0x20] sm:$0xf]
      %v188 = vld [vmem:[%s170 + $0x24] sm:$0xf]
      %v189 = vld [vmem:[%s170 + $0x28] sm:$0xf]
      %v190 = vld [vmem:[%s170 + $0x2c] sm:$0xf]
      %v191 = vld [vmem:[%s170 + $0x30] sm:$0xf]
      %v192 = vld [vmem:[%s170 + $0x34] sm:$0xf]
      %v193 = vld [vmem:[%s170 + $0x38] sm:$0xf]
      %v194 = vld [vmem:[%s170 + $0x3c] sm:$0xf]
      %v195 = vld [vmem:[%s1] sm:$0xf]
      %v196 = vld [vmem:[%s1 + $0x4] sm:$0xf]
      %v197 = vld [vmem:[%s1 + $0x8] sm:$0xf]
      %v198 = vld [vmem:[%s1 + $0xc] sm:$0xf]
      %v199 = vld [vmem:[%s1 + $0x10] sm:$0xf]
      %v200 = vld [vmem:[%s1 + $0x14] sm:$0xf]
      %v201 = vld [vmem:[%s1 + $0x18] sm:$0xf]
      %v202 = vld [vmem:[%s1 + $0x1c] sm:$0xf]
      %v203 = vld [vmem:[%s1 + $0x20] sm:$0xf]
      %v204 = vld [vmem:[%s1 + $0x24] sm:$0xf]
      %v205 = vld [vmem:[%s1 + $0x28] sm:$0xf]
      %v206 = vld [vmem:[%s1 + $0x2c] sm:$0xf]
      %v207 = vld [vmem:[%s1 + $0x30] sm:$0xf]
      %v208 = vld [vmem:[%s1 + $0x34] sm:$0xf]
      %v209 = vld [vmem:[%s1 + $0x38] sm:$0xf]
      %v210 = vld [vmem:[%s1 + $0x3c] sm:$0xf]
      %v227 = vunpack.c.l.b16 %v179
      %v228 = vunpack.c.l.b16 %v180
      %v229 = vunpack.c.l.b16 %v181
      %v230 = vunpack.c.l.b16 %v182
      %v231 = vunpack.c.l.b16 %v183
      %v232 = vunpack.c.l.b16 %v184
      %v233 = vunpack.c.l.b16 %v185
      %v234 = vunpack.c.l.b16 %v186
      %v235 = vunpack.c.l.b16 %v187
      %v236 = vunpack.c.l.b16 %v188
      %v237 = vunpack.c.l.b16 %v189
      %v238 = vunpack.c.l.b16 %v190
      %v239 = vunpack.c.l.b16 %v191
      %v240 = vunpack.c.l.b16 %v192
      %v241 = vunpack.c.l.b16 %v193
      %v242 = vunpack.c.l.b16 %v194
      %v243 = vpack.c.b16 %v228, %v227
      %v244 = vpack.c.b16 %v230, %v229
      %v245 = vpack.c.b16 %v232, %v231
      %v246 = vpack.c.b16 %v234, %v233
      %v247 = vpack.c.b16 %v236, %v235
      %v248 = vpack.c.b16 %v238, %v237
      %v249 = vpack.c.b16 %v240, %v239
      %v250 = vpack.c.b16 %v242, %v241
      %v275 = vunpack.c.l.b16 %v195
      %v276 = vunpack.c.l.b16 %v196
      %v277 = vunpack.c.l.b16 %v197
      %v278 = vunpack.c.l.b16 %v198
      %v279 = vunpack.c.l.b16 %v199
      %v280 = vunpack.c.l.b16 %v200
      %v281 = vunpack.c.l.b16 %v201
      %v282 = vunpack.c.l.b16 %v202
      %v283 = vunpack.c.l.b16 %v203
      %v284 = vunpack.c.l.b16 %v204
      %v285 = vunpack.c.l.b16 %v205
      %v286 = vunpack.c.l.b16 %v206
      %v287 = vunpack.c.l.b16 %v207
      %v288 = vunpack.c.l.b16 %v208
      %v289 = vunpack.c.l.b16 %v209
      %v290 = vunpack.c.l.b16 %v210
      %v291 = vpack.c.b16 %v276, %v275
      %v292 = vpack.c.b16 %v278, %v277
      %v293 = vpack.c.b16 %v280, %v279
      %v294 = vpack.c.b16 %v282, %v281
      %v295 = vpack.c.b16 %v284, %v283
      %v296 = vpack.c.b16 %v286, %v285
      %v297 = vpack.c.b16 %v288, %v287
      %v298 = vpack.c.b16 %v290, %v289
      %307 = vmatprep.subr.bf16.mxu0 0
      %308 = vmatpush1.bf16.msra.mxu0 %v298
      %309 = vmatprep.subr.bf16.mxu0 0
      %310 = vmatpush1.bf16.msra.mxu0 %v297
      %311 = vmatprep.subr.bf16.mxu0 0
      %312 = vmatpush1.bf16.msra.mxu0 %v296
      %313 = vmatprep.subr.bf16.mxu0 0
      %314 = vmatpush1.bf16.msra.mxu0 %v295
      %315 = vmatprep.subr.bf16.mxu0 0
      %316 = vmatpush1.bf16.msra.mxu0 %v294
      %317 = vmatprep.subr.bf16.mxu0 0
      %318 = vmatpush1.bf16.msra.mxu0 %v293
      %319 = vmatprep.subr.bf16.mxu0 0
      %320 = vmatpush1.bf16.msra.mxu0 %v292
      %321 = vmatprep.subr.bf16.mxu0 0
      %322 = vmatpush1.bf16.msra.mxu0 %v291
      %323 = vmatprep.subr.bf16.mxu0 0
      %324 = vmatpush2.bf16.msra.mxu0 0
      %325 = vmatprep.subr.bf16.mxu0 0
      %326 = vmatpush2.bf16.msra.mxu0 0
      %327 = vmatprep.subr.bf16.mxu0 0
      %328 = vmatpush2.bf16.msra.mxu0 0
      %329 = vmatprep.subr.bf16.mxu0 0
      %330 = vmatpush2.bf16.msra.mxu0 0
      %331 = vmatprep.subr.bf16.mxu0 0
      %332 = vmatpush2.bf16.msra.mxu0 0
      %333 = vmatprep.subr.bf16.mxu0 0
      %334 = vmatpush2.bf16.msra.mxu0 0
      %335 = vmatprep.subr.bf16.mxu0 0
      %336 = vmatpush2.bf16.msra.mxu0 0
      %337 = vmatprep.subr.bf16.mxu0 0
      %338 = vmatpush2.bf16.msra.mxu0 0
      %339 = vmatprep.mubr.bf16.mxu0 0
      %340 = vmatmul.mubr.bf16.gmra.mxu0 %v243
      %v341 = vpop.f32.mrf.mxu0
      %v342 = vadd.f32 0.0, %v341
      %v343 = vpop.f32.mrf.mxu0
      %v344 = vpop.f32.mrf.mxu0
      %v345 = vadd.f32 0.0, %v344
      %v346 = vpop.f32.mrf.mxu0
      %347 = vmatprep.mubr.bf16.mxu0 0
      %348 = vmatmul.mubr.bf16.gmra.mxu0 %v244
      %v349 = vpop.f32.mrf.mxu0
      %v350 = vadd.f32 0.0, %v349
      %v351 = vpop.f32.mrf.mxu0
      %v352 = vpop.f32.mrf.mxu0
      %v353 = vadd.f32 0.0, %v352
      %v354 = vpop.f32.mrf.mxu0
      %355 = vmatprep.mubr.bf16.mxu0 0
      %356 = vmatmul.mubr.bf16.gmra.mxu0 %v245
      %v357 = vpop.f32.mrf.mxu0
      %v358 = vadd.f32 0.0, %v357
      %v359 = vpop.f32.mrf.mxu0
      %v360 = vpop.f32.mrf.mxu0
      %v361 = vadd.f32 0.0, %v360
      %v362 = vpop.f32.mrf.mxu0
      %363 = vmatprep.mubr.bf16.mxu0 0
      %364 = vmatmul.mubr.bf16.gmra.mxu0 %v246
      %v365 = vpop.f32.mrf.mxu0
      %v366 = vadd.f32 0.0, %v365
      %v367 = vpop.f32.mrf.mxu0
      %v368 = vpop.f32.mrf.mxu0
      %v369 = vadd.f32 0.0, %v368
      %v370 = vpop.f32.mrf.mxu0
      %371 = vmatprep.mubr.bf16.mxu0 0
      %372 = vmatmul.mubr.bf16.gmra.mxu0 %v247
      %v373 = vpop.f32.mrf.mxu0
      %v374 = vadd.f32 0.0, %v373
      %v375 = vpop.f32.mrf.mxu0
      %v376 = vpop.f32.mrf.mxu0
      %v377 = vadd.f32 0.0, %v376
      %v378 = vpop.f32.mrf.mxu0
      %379 = vmatprep.mubr.bf16.mxu0 0
      %380 = vmatmul.mubr.bf16.gmra.mxu0 %v248
      %v381 = vpop.f32.mrf.mxu0
      %v382 = vadd.f32 0.0, %v381
      %v383 = vpop.f32.mrf.mxu0
      %v384 = vpop.f32.mrf.mxu0
      %v385 = vadd.f32 0.0, %v384
      %v386 = vpop.f32.mrf.mxu0
      %387 = vmatprep.mubr.bf16.mxu0 0
      %388 = vmatmul.mubr.bf16.gmra.mxu0 %v249
      %v389 = vpop.f32.mrf.mxu0
      %v390 = vadd.f32 0.0, %v389
      %v391 = vpop.f32.mrf.mxu0
      %v392 = vpop.f32.mrf.mxu0
      %v393 = vadd.f32 0.0, %v392
      %v394 = vpop.f32.mrf.mxu0
      %395 = vmatprep.mubr.bf16.mxu0 0
      %396 = vmatmul.mubr.bf16.gmra.mxu0 %v250
      %v397 = vpop.f32.mrf.mxu0
      %v398 = vadd.f32 0.0, %v397
      %v399 = vpop.f32.mrf.mxu0
      %v400 = vpop.f32.mrf.mxu0
      %v401 = vadd.f32 0.0, %v400
      %v402 = vpop.f32.mrf.mxu0
      %403 = vdwg.mxu0
      %v404 = vadd.f32 %v342, %v345
      %v405 = vadd.f32 %v404, %v350
      %v406 = vadd.f32 %v405, %v353
      %v407 = vadd.f32 %v406, %v358
      %v408 = vadd.f32 %v407, %v361
      %v409 = vadd.f32 %v408, %v366
      %v410 = vadd.f32 %v409, %v369
      %v411 = vadd.f32 %v410, %v374
      %v412 = vadd.f32 %v411, %v377
      %v413 = vadd.f32 %v412, %v382
      %v414 = vadd.f32 %v413, %v385
      %v415 = vadd.f32 %v414, %v390
      %v416 = vadd.f32 %v415, %v393
      %v417 = vadd.f32 %v416, %v398
      %v418 = vadd.f32 %v417, %v401
      %v419 = vrot.slane %v418, 4
      %v420 = vadd.f32 %v418, %v419
      %v421 = vrot.slane %v420, 2
      %v422 = vadd.f32 %v420, %v421
      %v423 = vrot.slane %v422, 1
      %v424 = vadd.f32 %v422, %v423
      %425 = vst [vmem:[%s174] sm:$0x1] %v424
      %v426 = vmul.f32 %v342, %v342
      %v427 = vmul.f32 %v345, %v345
      %v428 = vmul.f32 %v350, %v350
      %v429 = vmul.f32 %v353, %v353
      %v430 = vmul.f32 %v358, %v358
      %v431 = vmul.f32 %v361, %v361
      %v432 = vmul.f32 %v366, %v366
      %v433 = vmul.f32 %v369, %v369
      %v434 = vmul.f32 %v374, %v374
      %v435 = vmul.f32 %v377, %v377
      %v436 = vmul.f32 %v382, %v382
      %v437 = vmul.f32 %v385, %v385
      %v438 = vmul.f32 %v390, %v390
      %v439 = vmul.f32 %v393, %v393
      %v440 = vmul.f32 %v398, %v398
      %v441 = vmul.f32 %v401, %v401
      %v442 = vadd.f32 %v426, %v427
      %v443 = vadd.f32 %v442, %v428
      %v444 = vadd.f32 %v443, %v429
      %v445 = vadd.f32 %v444, %v430
      %v446 = vadd.f32 %v445, %v431
      %v447 = vadd.f32 %v446, %v432
      %v448 = vadd.f32 %v447, %v433
      %v449 = vadd.f32 %v448, %v434
      %v450 = vadd.f32 %v449, %v435
      %v451 = vadd.f32 %v450, %v436
      %v452 = vadd.f32 %v451, %v437
      %v453 = vadd.f32 %v452, %v438
      %v454 = vadd.f32 %v453, %v439
      %v455 = vadd.f32 %v454, %v440
      %v456 = vadd.f32 %v455, %v441
      %v457 = vrot.slane %v456, 4
      %v458 = vadd.f32 %v456, %v457
      %v459 = vrot.slane %v458, 2
      %v460 = vadd.f32 %v458, %v459
      %v461 = vrot.slane %v460, 1
      %v462 = vadd.f32 %v460, %v461
      %463 = vst [vmem:[%s177] sm:$0x1] %v462
      %p464 = scmp.lt.s32.totalorder %s15, 2
      %s465 = scalar_select %p464, %s15, 2
      %s466 = scalar_lea.vmem %s2, %s465
      %p467 = scmp.lt.s32.totalorder %s15, 2
      %s468 = scalar_select %p467, %s15, 2
      %s469 = scalar_lea.vmem %s3, %s468
      // Predicated region
      $region29: #{mlp_forward.2} parent=27 // pred_check
        %p470 = pneg %p80
      $region30: #{mlp_forward.2} parent=27 // pred_check_branch
        %472 = sbr.rel (%p470) target = $region32
      $region31: #{mlp_forward.2} parent=27 // pred_region
        _
      $region32: #{mlp_forward.2} parent=27 // pred_fallthru
        _
      // Predicated region
      $region33: #{mlp_forward.2} parent=27 // pred_check
        %p473 = pneg %p106
      $region34: #{mlp_forward.2} parent=27 // pred_check_branch
        %475 = sbr.rel (%p473) target = $region36
      $region35: #{mlp_forward.2} parent=27 // pred_region
        _
      $region36: #{mlp_forward.2} parent=27 // pred_fallthru
        _
    $region28: #{mlp_forward.2} parent=5 // pred_fallthru
      _
    %p476 = scmp.le.s32.totalorder 2, %s10
    // Predicated region
    $region37: #{mlp_forward.2} parent=5 // pred_check
      %p477 = pneg %p476
    $region38: #{mlp_forward.2} parent=5 // pred_check_branch
      %479 = sbr.rel (%p477) target = $region40
    $region39: #{mlp_forward.2} parent=5 // pred_region
      %s480 = ssub.s32 %s10, 2
      // Predicated region
      $region41: #{mlp_forward.2} parent=39 // pred_check
        %p481 = pneg %p86
      $region42: #{mlp_forward.2} parent=39 // pred_check_branch
        %483 = sbr.rel (%p481) target = $region44
      $region43: #{mlp_forward.2} parent=39 // pred_region
        %p484 = scmp.lt.s32.totalorder %s16, 2
        %s485 = scalar_select %p484, %s16, 2
        %s486 = scalar_lea.vmem %s2, %s485
      $region44: #{mlp_forward.2} parent=39 // pred_fallthru
        _
      // Predicated region
      $region45: #{mlp_forward.2} parent=39 // pred_check
        %p487 = pneg %p112
      $region46: #{mlp_forward.2} parent=39 // pred_check_branch
        %489 = sbr.rel (%p487) target = $region48
      $region47: #{mlp_forward.2} parent=39 // pred_region
        %p490 = scmp.lt.s32.totalorder %s16, 2
        %s491 = scalar_select %p490, %s16, 2
        %s492 = scalar_lea.vmem %s3, %s491
      $region48: #{mlp_forward.2} parent=39 // pred_fallthru
        _
    $region40: #{mlp_forward.2} parent=5 // pred_fallthru
      _
  $region6: #{mlp_forward.2} parent=0 // loop_footer
    %s14 = sadd.s32 1, %s10
  $region7: #{mlp_forward.2} parent=0 // loop_footer_branch
    %9 = sbr.rel target = $region3
  $region8: #{mlp_forward.2} parent=0 // loop_exit
    _

</llo_original>
